<compile_context>
chip_gen: v6e
topology: v6e:2x2x1
jax: 0.10.0
libtpu: 0.0.40
codegen_flags: <defaults>
</compile_context>

<pallas_src>
import functools

import jax
import jax.numpy as jnp
from jax.experimental import pallas as pl
from jax.experimental.pallas import tpu as pltpu


_SUBLANE = 16  # bf16 sublane packing (16 rows per packed vreg tile)


def _round_up(n, m):
    return ((n + m - 1) // m) * m


def _batch_tiling(batch):
    """Return (block_b, batch_pad).

    Tiles are multiples of 16 rows (bf16 sublane packing).  Batches big enough
    to split get >= 2 programs so the "parallel" grid axis can shard across
    v7x's two TensorCores; blocks are capped near 512 rows (amortizes the
    ~0.35us/step pipeline overhead without ballooning VMEM); padding stays
    below one sublane tile per program.
    """
    if batch <= 2 * _SUBLANE:
        bb = _round_up(batch, _SUBLANE)
        return bb, bb
    n_prog = max(2, pl.cdiv(batch, 512))
    bb = _round_up(pl.cdiv(batch, n_prog), _SUBLANE)
    return bb, n_prog * bb


def prepare_mln_params(weight, bias, *, num_classes, num_dendrites,
                       mxu_dtype=jnp.bfloat16):
    """One-time parameter preprocessing (hoisted out of the forward).

    weight: (F*C, D*C)  rows are the C class-copies of the input (torch
            `x.repeat(1, C)` layout); columns dendrite-major (col = d*C + c).
    bias:   (1, D*C)
    """
    dc = num_dendrites * num_classes
    assert weight.shape[1] == dc and weight.shape[0] % num_classes == 0
    feat = weight.shape[0] // num_classes
    bias = jnp.asarray(bias, jnp.float32).reshape(1, dc)

    # Collapse torch's repeat algebraically (done ONCE here, not per forward):
    #   x.repeat(1, C) @ W == x @ sum_c W[c*F:(c+1)*F, :]
    w_folded = jnp.asarray(weight, jnp.float32).reshape(
        num_classes, feat, dc).sum(axis=0)                       # (F, D*C)

    # Pad the N (lane) dim to a multiple of 128: full MXU width, unmasked
    # stores of h, vreg-aligned layout.  Dummy columns get zero weight and a
    # very negative bias so they can never win a max.
    dc_pad = max(128, _round_up(dc, 128))
    if dc_pad != dc:
        w_folded = jnp.pad(w_folded, ((0, 0), (0, dc_pad - dc)))
        bias = jnp.pad(bias, ((0, 0), (0, dc_pad - dc)),
                       constant_values=float(jnp.finfo(jnp.float32).min) / 2)

    # bf16 MXU inputs; everything after the matmul stays f32 in the kernel.
    w_folded = w_folded.astype(mxu_dtype)
    return {"w": w_folded, "b": bias}


def _mln_kernel(x_ref, w_ref, b_ref, y_ref, *, num_classes, num_dendrites):
    # x: (bb, F) bf16   w: (F, dc_pad) bf16   b: (1, dc_pad) f32   y: (bb, C) f32
    # Dendritic pre-activations on the MXU, f32 accumulation.
    h = jnp.dot(x_ref[...], w_ref[...], preferred_element_type=jnp.float32)
    h = h + b_ref[...]                                           # (bb, dc_pad)

    # Max over the D real dendrites.  Columns are dendrite-major (col = d*C+c),
    # so each dendrite is a contiguous lane slice of width C.  Unrolled
    # jnp.maximum keeps this on the VPU with no reshape.
    # TODO(synk): for large D, switch to a pltpu.roll log2(D) tree over the
    #             -BIG-padded row to cut the serial max chain.
    C, D = num_classes, num_dendrites
    z = h[:, 0:C]
    for d in range(1, D):
        z = jnp.maximum(z, h[:, d * C:(d + 1) * C])

    # Numerically stable softmax over the class axis, all in f32.
    z = z - jnp.max(z, axis=-1, keepdims=True)
    e = jnp.exp(z)
    denom = jnp.sum(e, axis=-1, keepdims=True)
    # Exact divide: the previous approx reciprocal broke sum(y) == 1 tolerance.
    y_ref[...] = (e / denom).astype(y_ref.dtype)


def mln_classifier_forward(x, params, *, num_classes, num_dendrites):
    """Forward pass.  x: (B, F) f32; params from prepare_mln_params.
    Returns (B, C) softmax probabilities (f32)."""
    w, b = params["w"], params["b"]
    feat, dc_pad = w.shape
    batch = x.shape[0]
    assert x.shape == (batch, feat)

    block_b, batch_pad = _batch_tiling(batch)
    x_p = x.astype(w.dtype)
    if batch_pad != batch:
        x_p = jnp.pad(x_p, ((0, batch_pad - batch), (0, 0)))
    grid = (batch_pad // block_b,)

    kernel = functools.partial(
        _mln_kernel, num_classes=num_classes, num_dendrites=num_dendrites)

    in_bytes = jnp.dtype(w.dtype).itemsize
    cost = pl.CostEstimate(
        flops=2 * batch_pad * feat * dc_pad
        + 6 * batch_pad * num_classes * num_dendrites,
        transcendentals=batch_pad * num_classes,                 # exp
        bytes_accessed=(batch_pad * feat * in_bytes              # x (bf16)
                        + feat * dc_pad * in_bytes               # weight (bf16)
                        + dc_pad * 4                             # bias (f32)
                        + batch_pad * num_classes * 4),          # y (f32)
    )

    # VMEM budget: resident weight (x2 pipelining allocation) + bias +
    # double-buffered x / out tiles + headroom for the (block_b, dc_pad) f32 h.
    vmem_est = (2 * feat * dc_pad * in_bytes
                + 2 * dc_pad * 4
                + 2 * block_b * feat * in_bytes
                + 2 * block_b * num_classes * 4
                + 2 * block_b * dc_pad * 4)
    # Raise the scoped limit explicitly (v5e default is only 16 MiB); never
    # exceed v7x's 64 MiB physical per-TC VMEM.
    vmem_limit = int(min(64 * 2**20, max(32 * 2**20, 2 * vmem_est)))

    y_pad = pl.pallas_call(
        kernel,
        out_shape=jax.ShapeDtypeStruct((batch_pad, num_classes), jnp.float32),
        grid_spec=pltpu.PrefetchScalarGridSpec(
            num_scalar_prefetch=0,
            grid=grid,
            in_specs=[
                pl.BlockSpec((block_b, feat), lambda i: (i, 0)),
                # Weight/bias: constant index_map -> DMA'd once, VMEM-resident.
                # TODO(synk): for large F*dc on v7x, single-buffer these
                #             (pipeline_mode=pl.Buffered(1)) and add a K (feat)
                #             grid axis with an f32 accumulator + pl.when
                #             init/finalize once feat*dc_pad*2B exceeds ~20 MiB.
                pl.BlockSpec((feat, dc_pad), lambda i: (0, 0)),
                pl.BlockSpec((1, dc_pad), lambda i: (0, 0)),
            ],
            # C < 128 lanes => masked output stores; negligible while the
            # matmul dominates.
            # TODO(synk): if ever store-bound (huge B, tiny C), present a
            #             lane-dense (block_b*C/128, 128) output slab instead.
            out_specs=pl.BlockSpec((block_b, num_classes), lambda i: (i, 0)),
        ),
        compiler_params=pltpu.CompilerParams(
            dimension_semantics=("parallel",),
            vmem_limit_bytes=vmem_limit,
        ),
        cost_estimate=cost,
    )(x_p, w, b)

    return y_pad[:batch]


def _reference_f32(x, weight, bias, *, num_classes, num_dendrites):
    # Literal translation of the torch forward (repeat -> dendritic maxout ->
    # softmax), full f32, no folding / padding.
    x_rep = jnp.tile(x, (1, num_classes))
    h = x_rep @ weight + bias
    h = h.reshape(x.shape[0], num_dendrites, num_classes)
    z = jnp.max(h, axis=1)
    return jax.nn.softmax(z, axis=1)


def _reference_matched(x, params, *, num_classes, num_dendrites):
    # Same math as the kernel (folded bf16 weight, f32 accumulation) in plain
    # JAX -- tight structural check independent of bf16 rounding.
    w, b = params["w"], params["b"]
    dc = num_classes * num_dendrites
    h = jnp.dot(x.astype(w.dtype), w, preferred_element_type=jnp.float32) + b
    h = h[:, :dc].reshape(x.shape[0], num_dendrites, num_classes)
    z = jnp.max(h, axis=1)
    return jax.nn.softmax(z, axis=1)


if __name__ == "__main__":
    B, F, C, D = 48, 32, 4, 8  # batch, in_features, num_classes, dendrites/neuron

    key = jax.random.PRNGKey(0)
    kx, kw, kb = jax.random.split(key, 3)

    x = jax.random.normal(kx, (B, F), dtype=jnp.float32)

    fan_in = F * C
    weight = jax.random.normal(kw, (fan_in, D * C), dtype=jnp.float32) / jnp.sqrt(
        jnp.float32(fan_in))
    bias = jax.random.normal(kb, (1, D * C), dtype=jnp.float32) * 0.01

    params = prepare_mln_params(weight, bias, num_classes=C, num_dendrites=D)
    y = mln_classifier_forward(x, params, num_classes=C, num_dendrites=D)
    y = jax.block_until_ready(y)

    assert y.shape == (B, C)
    # Exact divide in the kernel -> rows sum to 1 up to f32 rounding.
    assert jnp.allclose(jnp.sum(y, axis=1), 1.0, atol=1e-4)

    # Structural check against the matched (bf16-folded) reference.
    y_ref_m = _reference_matched(x, params, num_classes=C, num_dendrites=D)
    assert jnp.allclose(y, y_ref_m, atol=1e-3, rtol=1e-3)

    # Check against the literal f32 torch translation (tolerance covers the
    # bf16 MXU inputs).
    y_ref = _reference_f32(x, weight, bias, num_classes=C, num_dendrites=D)
    assert jnp.allclose(y, y_ref, atol=2e-2, rtol=2e-2)

    print("KERNEL_OK")
</pallas_src>

<mosaic_0001>
module attributes {stable_mosaic.version = 11 : i64} {
  func.func @_mln_kernel(%arg0: i32, %arg1: memref<32x32xbf16, #tpu.memory_space<vmem>>, %arg2: memref<32x128xbf16, #tpu.memory_space<vmem>>, %arg3: memref<1x128xf32, #tpu.memory_space<vmem>>, %arg4: memref<32x4xf32, #tpu.memory_space<vmem>>) attributes {dimension_semantics = [#tpu.dimension_semantics<parallel>], iteration_bounds = array<i64: 2>, scalar_prefetch = 0 : i64, scratch_operands = 0 : i64, tpu.core_type = #tpu.core_type<tc>, window_params = [{transform_indices = @transform_0, window_bounds = array<i64: 32, 32>}, {pipeline_mode = #tpu.pipeline_mode<synchronous>, transform_indices = @transform_1, window_bounds = array<i64: 32, 128>}, {pipeline_mode = #tpu.pipeline_mode<synchronous>, transform_indices = @transform_2, window_bounds = array<i64: 1, 128>}, {transform_indices = @transform_3, window_bounds = array<i64: 32, 4>}]} {
    %c0 = arith.constant 0 : index
    %c0_0 = arith.constant 0 : index
    %0 = vector.load %arg1[%c0, %c0_0] : memref<32x32xbf16, #tpu.memory_space<vmem>>, vector<32x32xbf16>
    %c0_1 = arith.constant 0 : index
    %c0_2 = arith.constant 0 : index
    %1 = vector.load %arg2[%c0_1, %c0_2] : memref<32x128xbf16, #tpu.memory_space<vmem>>, vector<32x128xbf16>
    %cst = arith.constant dense<0.000000e+00> : vector<32x128xf32>
    %2 = tpu.matmul %0, %1, %cst {dimension_numbers = #tpu.dot_dimension_numbers<[1], [0], [0], [1], [0, 0, 1, 1], [], []>} : vector<32x32xbf16>, vector<32x128xbf16>, vector<32x128xf32> -> vector<32x128xf32>
    %c0_3 = arith.constant 0 : index
    %c0_4 = arith.constant 0 : index
    %3 = vector.load %arg3[%c0_3, %c0_4] : memref<1x128xf32, #tpu.memory_space<vmem>>, vector<1x128xf32>
    %4 = vector.broadcast %3 : vector<1x128xf32> to vector<32x128xf32>
    %5 = arith.addf %2, %4 : vector<32x128xf32>
    %6 = vector.extract_strided_slice %5 {offsets = [0, 0], sizes = [32, 4], strides = [1, 1]} : vector<32x128xf32> to vector<32x4xf32>
    %7 = vector.extract_strided_slice %5 {offsets = [0, 4], sizes = [32, 4], strides = [1, 1]} : vector<32x128xf32> to vector<32x4xf32>
    %8 = arith.maximumf %6, %7 : vector<32x4xf32>
    %9 = vector.extract_strided_slice %5 {offsets = [0, 8], sizes = [32, 4], strides = [1, 1]} : vector<32x128xf32> to vector<32x4xf32>
    %10 = arith.maximumf %8, %9 : vector<32x4xf32>
    %11 = vector.extract_strided_slice %5 {offsets = [0, 12], sizes = [32, 4], strides = [1, 1]} : vector<32x128xf32> to vector<32x4xf32>
    %12 = arith.maximumf %10, %11 : vector<32x4xf32>
    %13 = vector.extract_strided_slice %5 {offsets = [0, 16], sizes = [32, 4], strides = [1, 1]} : vector<32x128xf32> to vector<32x4xf32>
    %14 = arith.maximumf %12, %13 : vector<32x4xf32>
    %15 = vector.extract_strided_slice %5 {offsets = [0, 20], sizes = [32, 4], strides = [1, 1]} : vector<32x128xf32> to vector<32x4xf32>
    %16 = arith.maximumf %14, %15 : vector<32x4xf32>
    %17 = vector.extract_strided_slice %5 {offsets = [0, 24], sizes = [32, 4], strides = [1, 1]} : vector<32x128xf32> to vector<32x4xf32>
    %18 = arith.maximumf %16, %17 : vector<32x4xf32>
    %19 = vector.extract_strided_slice %5 {offsets = [0, 28], sizes = [32, 4], strides = [1, 1]} : vector<32x128xf32> to vector<32x4xf32>
    %20 = arith.maximumf %18, %19 : vector<32x4xf32>
    %cst_5 = arith.constant dense<0xFF800000> : vector<32xf32>
    %21 = vector.multi_reduction <maximumf>, %20, %cst_5 [1] : vector<32x4xf32> to vector<32xf32>
    %22 = vector.shape_cast %21 : vector<32xf32> to vector<32x1xf32>
    %23 = vector.broadcast %22 : vector<32x1xf32> to vector<32x4xf32>
    %24 = arith.subf %20, %23 : vector<32x4xf32>
    %25 = math.exp %24 : vector<32x4xf32>
    %cst_6 = arith.constant dense<0.000000e+00> : vector<32xf32>
    %26 = vector.multi_reduction <add>, %25, %cst_6 [1] : vector<32x4xf32> to vector<32xf32>
    %27 = vector.shape_cast %26 : vector<32xf32> to vector<32x1xf32>
    %28 = vector.broadcast %27 : vector<32x1xf32> to vector<32x4xf32>
    %29 = arith.divf %25, %28 : vector<32x4xf32>
    %c0_7 = arith.constant 0 : index
    %c0_8 = arith.constant 0 : index
    %30 = vector.load %arg4[%c0_7, %c0_8] : memref<32x4xf32, #tpu.memory_space<vmem>>, vector<32x4xf32>
    tpu.vector_store %arg4[%c0_7, %c0_8], %29 {strides = array<i32>} : memref<32x4xf32, #tpu.memory_space<vmem>>, vector<32x4xf32>,
    return
  }
  func.func @transform_0(%arg0: i32) -> (i32, i32) {
    %c0_i32 = arith.constant 0 : i32
    %c0_i32_0 = arith.constant 0 : i32
    return %arg0, %c0_i32 : i32, i32
  }
  func.func @transform_1(%arg0: i32) -> (i32, i32) {
    %c0_i32 = arith.constant 0 : i32
    %c0_i32_0 = arith.constant 0 : i32
    %c0_i32_1 = arith.constant 0 : i32
    return %c0_i32, %c0_i32_0 : i32, i32
  }
  func.func @transform_2(%arg0: i32) -> (i32, i32) {
    %c0_i32 = arith.constant 0 : i32
    %c0_i32_0 = arith.constant 0 : i32
    %c0_i32_1 = arith.constant 0 : i32
    return %c0_i32, %c0_i32_0 : i32, i32
  }
  func.func @transform_3(%arg0: i32) -> (i32, i32) {
    %c0_i32 = arith.constant 0 : i32
    %c0_i32_0 = arith.constant 0 : i32
    return %arg0, %c0_i32 : i32, i32
  }
}

</mosaic_0001>

<llo_original>
// kernel: tpu_custom_call.1
$region0: #{tpu_custom_call.1}
  #allocation0 [shape = 'u32[]', space=smem, size = 0x4, offset = 0x4, fixed_abs, tag = 'smem constant byte address 0x4 - core index']
  #allocation1 [shape = 'u32[144,128]{1,0:T(1,128)}', space=vmem, size = 0x12000, scoped, tag = 'internal scratch']
  %s0 = inlined_call_operand.vmem [shape: bf16[64,32], index: 0, kind: input, shape index: {}]
  %s1 = inlined_call_operand.vmem [shape: bf16[32,128], index: 1, kind: input, shape index: {}]
  %s2 = inlined_call_operand.vmem [shape: f32[1,128], index: 2, kind: input, shape index: {}]
  %s3 = inlined_call_operand.vmem [shape: f32[64,4], index: 3, kind: output, shape index: {}]
  %s4 = sld [smem:[#allocation0]]
  $region45: #{tpu_custom_call.1} parent=0
    _
  %s6 = ssub.s32 1, %s4
  %s7 = scalar_select 0, %s6, %s4
  loop: start=0, step=1, limit=4
  $region2: #{tpu_custom_call.1} parent=0 // loop_pre_header
    _
  $region3: #{tpu_custom_call.1} parent=0 // loop_header
    %s9 = sphi 0, %s13
    %p10 = scmp.ge.s32.totalorder %s9, 4
    %s19 = sphi 0, %s21
    %s22 = sphi 0, %s19
    %s23 = sphi 0, %s22
    %s39 = sphi 0, %s23
    %s43 = sphi 0, %s43
    %s45 = sphi 0, %s43
    %s46 = sphi 0, %s45
    %s60 = sphi 0, %s46
    %s64 = sphi 0, %s64
    %s66 = sphi 0, %s64
    %s67 = sphi 0, %s66
    %s81 = sphi 0, %s67
    %s87 = sphi 0, %s89
    %s90 = sphi 0, %s87
    %s91 = sphi 0, %s90
    %s107 = sphi 0, %s91
  $region4: #{tpu_custom_call.1} parent=0 // loop_header_branch
    %12 = sbr.rel (%p10) target = $region8
  $region5: #{tpu_custom_call.1} parent=0 // loop_body
    %s14 = ssub.s32 %s9, 1
    %s15 = ssub.s32 %s9, 2
    %s16 = sadd.s32 %s9, 1
    %s17 = ssub.s32 %s9, %s16
    %p18 = scmp.eq.s32.totalorder %s17, 0
    %s20 = sadd.s32 %s19, 1
    %s21 = scalar_select %p18, %s19, %s20
    %p24 = pneg %p18
    %p25 = scmp.eq.s32.totalorder %s9, 1
    %p26 = por %p24, %p25
    %p27 = scmp.ne.s32.totalorder %s19, %s22
    %p28 = scmp.eq.s32.totalorder %s9, 0
    %p29 = por %p27, %p28
    %p30 = scmp.ne.s32.totalorder %s19, %s22
    %p31 = scmp.eq.s32.totalorder %s14, 1
    %p32 = por %p30, %p31
    %p33 = scmp.ne.s32.totalorder %s22, %s23
    %p34 = scmp.eq.s32.totalorder %s14, 0
    %p35 = por %p33, %p34
    %p36 = scmp.ne.s32.totalorder %s22, %s23
    %p37 = scmp.eq.s32.totalorder %s15, 1
    %p38 = por %p36, %p37
    %p40 = scmp.ne.s32.totalorder %s23, %s39
    %p41 = scmp.eq.s32.totalorder %s15, 0
    %p42 = por %p40, %p41
    %s44 = sadd.s32 %s43, 1
    %p47 = scmp.eq.s32.totalorder %s9, 1
    %p48 = scmp.ne.s32.totalorder %s43, %s45
    %p49 = scmp.eq.s32.totalorder %s9, 0
    %p50 = por %p48, %p49
    %p51 = scmp.ne.s32.totalorder %s43, %s45
    %p52 = scmp.eq.s32.totalorder %s14, 1
    %p53 = por %p51, %p52
    %p54 = scmp.ne.s32.totalorder %s45, %s46
    %p55 = scmp.eq.s32.totalorder %s14, 0
    %p56 = por %p54, %p55
    %p57 = scmp.ne.s32.totalorder %s45, %s46
    %p58 = scmp.eq.s32.totalorder %s15, 1
    %p59 = por %p57, %p58
    %p61 = scmp.ne.s32.totalorder %s46, %s60
    %p62 = scmp.eq.s32.totalorder %s15, 0
    %p63 = por %p61, %p62
    %s65 = sadd.s32 %s64, 1
    %p68 = scmp.eq.s32.totalorder %s9, 1
    %p69 = scmp.ne.s32.totalorder %s64, %s66
    %p70 = scmp.eq.s32.totalorder %s9, 0
    %p71 = por %p69, %p70
    %p72 = scmp.ne.s32.totalorder %s64, %s66
    %p73 = scmp.eq.s32.totalorder %s14, 1
    %p74 = por %p72, %p73
    %p75 = scmp.ne.s32.totalorder %s66, %s67
    %p76 = scmp.eq.s32.totalorder %s14, 0
    %p77 = por %p75, %p76
    %p78 = scmp.ne.s32.totalorder %s66, %s67
    %p79 = scmp.eq.s32.totalorder %s15, 1
    %p80 = por %p78, %p79
    %p82 = scmp.ne.s32.totalorder %s67, %s81
    %p83 = scmp.eq.s32.totalorder %s15, 0
    %p84 = por %p82, %p83
    %s85 = ssub.s32 %s9, %s16
    %p86 = scmp.eq.s32.totalorder %s85, 0
    %s88 = sadd.s32 %s87, 1
    %s89 = scalar_select %p86, %s87, %s88
    %p92 = pneg %p86
    %p93 = scmp.eq.s32.totalorder %s9, 1
    %p94 = por %p92, %p93
    %p95 = scmp.ne.s32.totalorder %s87, %s90
    %p96 = scmp.eq.s32.totalorder %s9, 0
    %p97 = por %p95, %p96
    %p98 = scmp.ne.s32.totalorder %s87, %s90
    %p99 = scmp.eq.s32.totalorder %s14, 1
    %p100 = por %p98, %p99
    %p101 = scmp.ne.s32.totalorder %s90, %s91
    %p102 = scmp.eq.s32.totalorder %s14, 0
    %p103 = por %p101, %p102
    %p104 = scmp.ne.s32.totalorder %s90, %s91
    %p105 = scmp.eq.s32.totalorder %s15, 1
    %p106 = por %p104, %p105
    %p108 = scmp.ne.s32.totalorder %s91, %s107
    %p109 = scmp.eq.s32.totalorder %s15, 0
    %p110 = por %p108, %p109
    %p111 = scmp.le.s32.totalorder 1, %s9
    %p112 = scmp.lt.s32.totalorder %s9, 3
    %p113 = pnand %p111, %p112
    %p114 = pneg %p113
    // Predicated region
    $region9: #{tpu_custom_call.1} parent=5 // pred_check
      _
    $region10: #{tpu_custom_call.1} parent=5 // pred_check_branch
      %116 = sbr.rel (%p113) target = $region12
    $region11: #{tpu_custom_call.1} parent=5 // pred_region
      %s117 = ssub.s32 %s9, 1
      // Predicated region
      $region13: #{tpu_custom_call.1} parent=11 // pred_check
        %p118 = pneg %p56
      $region14: #{tpu_custom_call.1} parent=11 // pred_check_branch
        %120 = sbr.rel (%p118) target = $region16
      $region15: #{tpu_custom_call.1} parent=11 // pred_region
        _
      $region16: #{tpu_custom_call.1} parent=11 // pred_fallthru
        _
      // Predicated region
      $region17: #{tpu_custom_call.1} parent=11 // pred_check
        %p121 = pneg %p77
      $region18: #{tpu_custom_call.1} parent=11 // pred_check_branch
        %123 = sbr.rel (%p121) target = $region20
      $region19: #{tpu_custom_call.1} parent=11 // pred_region
        _
      $region20: #{tpu_custom_call.1} parent=11 // pred_fallthru
        _
    $region12: #{tpu_custom_call.1} parent=5 // pred_fallthru
      _
    %p124 = scmp.lt.s32.totalorder %s9, 2
    // Predicated region
    $region21: #{tpu_custom_call.1} parent=5 // pred_check
      %p125 = pneg %p124
    $region22: #{tpu_custom_call.1} parent=5 // pred_check_branch
      %127 = sbr.rel (%p125) target = $region24
    $region23: #{tpu_custom_call.1} parent=5 // pred_region
      // Predicated region
      $region25: #{tpu_custom_call.1} parent=23 // pred_check
        %p128 = pneg %p29
      $region26: #{tpu_custom_call.1} parent=23 // pred_check_branch
        %130 = sbr.rel (%p128) target = $region28
      $region27: #{tpu_custom_call.1} parent=23 // pred_region
        %s131 = smul.u32 4, %s9
        %p132 = scmp.lt.s32.totalorder %s131, 7
        %s133 = scalar_select %p132, %s131, 7
        %s134 = smul.addr %s133, 4
        %s135 = scalar_lea.vmem %s0, %s134
        %s136 = smul.u32 4, %s9
      $region28: #{tpu_custom_call.1} parent=23 // pred_fallthru
        _
    $region24: #{tpu_custom_call.1} parent=5 // pred_fallthru
      _
    %p137 = scmp.le.s32.totalorder 1, %s9
    %p138 = scmp.lt.s32.totalorder %s9, 3
    %p139 = pnand %p137, %p138
    %p140 = pneg %p139
    // Predicated region
    $region29: #{tpu_custom_call.1} parent=5 // pred_check
      _
    $region30: #{tpu_custom_call.1} parent=5 // pred_check_branch
      %142 = sbr.rel (%p139) target = $region32
    $region31: #{tpu_custom_call.1} parent=5 // pred_region
      %s143 = ssub.s32 %s9, 1
      %s144 = smul.u32 4, %s14
      %p145 = scmp.lt.s32.totalorder %s144, 7
      %s146 = scalar_select %p145, %s144, 7
      %s147 = smul.addr %s146, 4
      %s148 = scalar_lea.vmem %s0, %s147
      %p149 = pneg %p35
      %p150 = pneg %p32
      %p151 = pneg %p56
      %p152 = pneg %p53
      %p153 = pneg %p77
      %p154 = pneg %p74
      %p155 = pneg %p103
      %p156 = pneg %p100
      %s157 = smul.u32 4, %s14
      %p158 = scmp.lt.s32.totalorder %s157, 7
      %s159 = scalar_select %p158, %s157, 7
      %s160 = smul.addr %s159, 8
      %s161 = scalar_lea.vmem %s3, %s160
      %s162 = smul.u32 4, %s14
      %p163 = scmp.lt.s32.totalorder %s162, 7
      %s164 = scalar_select %p163, %s162, 7
      %s165 = smul.addr %s164, 4
      %s166 = scalar_lea.vmem %s0, %s165
      %s167 = smul.u32 4, %s14
      %s168 = smul.u32 4, %s14
      %p169 = scmp.lt.s32.totalorder %s168, 7
      %s170 = scalar_select %p169, %s168, 7
      %s171 = smul.addr %s170, 8
      %s172 = scalar_lea.vmem %s3, %s171
      %s173 = smul.u32 4, %s14
      %v175 = vld [vmem:[%s166] sm:$0xf]
      %v176 = vld [vmem:[%s166 + $0x4] sm:$0xf]
      %v177 = vld [vmem:[%s166 + $0x8] sm:$0xf]
      %v178 = vld [vmem:[%s166 + $0xc] sm:$0xf]
      %v179 = vld [vmem:[%s1] sm:$0xf]
      %v180 = vld [vmem:[%s1 + $0x4] sm:$0xf]
      %v181 = vld [vmem:[%s1 + $0x8] sm:$0xf]
      %v182 = vld [vmem:[%s1 + $0xc] sm:$0xf]
      %v183 = vld [vmem:[%s2] sm:$0x1]
      %v185 = vlaneseq
      %v186 = vshrl.u32 %v185, 7
      %v187 = vsub.s32 0, %v186
      %v188 = vrot.slane %v183, %v187
      %v194 = vunpack.c.l.b16 %v175
      %v195 = vunpack.c.l.b16 %v176
      %v196 = vunpack.c.l.b16 %v177
      %v197 = vunpack.c.l.b16 %v178
      %v198 = vpack.c.b16 %v195, %v194
      %v199 = vpack.c.b16 %v197, %v196
      %v204 = vunpack.c.l.b16 %v179
      %v205 = vunpack.c.l.b16 %v180
      %v206 = vunpack.c.l.b16 %v181
      %v207 = vunpack.c.l.b16 %v182
      %v208 = vpack.c.b16 %v205, %v204
      %v209 = vpack.c.b16 %v207, %v206
      %vm212 = vcmask 261120
      %v214 = vsel %vm212, %v198, 0
      %v217 = vsel %vm212, %v199, 0
      %219 = vmatprep.subr.bf16.mxu0 0
      %220 = vmatpush1.bf16.msra.mxu0 0
      %221 = vmatprep.subr.bf16.mxu0 0
      %222 = vmatpush1.bf16.msra.mxu0 0
      %223 = vmatprep.subr.bf16.mxu0 0
      %224 = vmatpush1.bf16.msra.mxu0 0
      %225 = vmatprep.subr.bf16.mxu0 0
      %226 = vmatpush1.bf16.msra.mxu0 0
      %227 = vmatprep.subr.bf16.mxu0 0
      %228 = vmatpush1.bf16.msra.mxu0 0
      %229 = vmatprep.subr.bf16.mxu0 0
      %230 = vmatpush1.bf16.msra.mxu0 0
      %231 = vmatprep.subr.bf16.mxu0 0
      %232 = vmatpush1.bf16.msra.mxu0 %v209
      %233 = vmatprep.subr.bf16.mxu0 0
      %234 = vmatpush1.bf16.msra.mxu0 %v208
      %235 = vmatprep.subr.bf16.mxu0 0
      %236 = vmatpush2.bf16.msra.mxu0 0
      %237 = vmatprep.subr.bf16.mxu0 0
      %238 = vmatpush2.bf16.msra.mxu0 0
      %239 = vmatprep.subr.bf16.mxu0 0
      %240 = vmatpush2.bf16.msra.mxu0 0
      %241 = vmatprep.subr.bf16.mxu0 0
      %242 = vmatpush2.bf16.msra.mxu0 0
      %243 = vmatprep.subr.bf16.mxu0 0
      %244 = vmatpush2.bf16.msra.mxu0 0
      %245 = vmatprep.subr.bf16.mxu0 0
      %246 = vmatpush2.bf16.msra.mxu0 0
      %247 = vmatprep.subr.bf16.mxu0 0
      %248 = vmatpush2.bf16.msra.mxu0 0
      %249 = vmatprep.subr.bf16.mxu0 0
      %250 = vmatpush2.bf16.msra.mxu0 0
      %251 = vmatprep.mubr.bf16.mxu0 0
      %252 = vmatmul.mubr.bf16.gmra.mxu0 %v214
      %v253 = vpop.f32.mrf.mxu0
      %v254 = vadd.f32 %v188, %v253
      %v255 = vpop.f32.mrf.mxu0
      %v256 = vpop.f32.mrf.mxu0
      %v257 = vadd.f32 %v188, %v256
      %v258 = vpop.f32.mrf.mxu0
      %259 = vmatprep.mubr.bf16.mxu0 0
      %260 = vmatmul.mubr.bf16.gmra.mxu0 %v217
      %v261 = vpop.f32.mrf.mxu0
      %v262 = vadd.f32 %v188, %v261
      %v263 = vpop.f32.mrf.mxu0
      %v264 = vpop.f32.mrf.mxu0
      %v265 = vadd.f32 %v188, %v264
      %v266 = vpop.f32.mrf.mxu0
      %267 = vdwg.mxu0
      %272 = vrot.lane.b32.xlu0 %v254, 124
      %v273 = vpop.permute.xlu0 %272
      %274 = vrot.lane.b32.xlu0 %v257, 124
      %v275 = vpop.permute.xlu0 %274
      %276 = vrot.lane.b32.xlu0 %v262, 124
      %v277 = vpop.permute.xlu0 %276
      %278 = vrot.lane.b32.xlu0 %v265, 124
      %v279 = vpop.permute.xlu0 %278
      %v284 = vmax.f32 %v254, %v273
      %v285 = vmax.f32 %v257, %v275
      %v286 = vmax.f32 %v262, %v277
      %v287 = vmax.f32 %v265, %v279
      %288 = vrot.lane.b32.xlu0 %v254, 120
      %v289 = vpop.permute.xlu0 %288
      %290 = vrot.lane.b32.xlu0 %v257, 120
      %v291 = vpop.permute.xlu0 %290
      %292 = vrot.lane.b32.xlu0 %v262, 120
      %v293 = vpop.permute.xlu0 %292
      %294 = vrot.lane.b32.xlu0 %v265, 120
      %v295 = vpop.permute.xlu0 %294
      %v300 = vmax.f32 %v284, %v289
      %v301 = vmax.f32 %v285, %v291
      %v302 = vmax.f32 %v286, %v293
      %v303 = vmax.f32 %v287, %v295
      %304 = vrot.lane.b32.xlu0 %v254, 116
      %v305 = vpop.permute.xlu0 %304
      %306 = vrot.lane.b32.xlu0 %v257, 116
      %v307 = vpop.permute.xlu0 %306
      %308 = vrot.lane.b32.xlu0 %v262, 116
      %v309 = vpop.permute.xlu0 %308
      %310 = vrot.lane.b32.xlu0 %v265, 116
      %v311 = vpop.permute.xlu0 %310
      %v316 = vmax.f32 %v300, %v305
      %v317 = vmax.f32 %v301, %v307
      %v318 = vmax.f32 %v302, %v309
      %v319 = vmax.f32 %v303, %v311
      %320 = vrot.lane.b32.xlu0 %v254, 112
      %v321 = vpop.permute.xlu0 %320
      %322 = vrot.lane.b32.xlu0 %v257, 112
      %v323 = vpop.permute.xlu0 %322
      %324 = vrot.lane.b32.xlu0 %v262, 112
      %v325 = vpop.permute.xlu0 %324
      %326 = vrot.lane.b32.xlu0 %v265, 112
      %v327 = vpop.permute.xlu0 %326
      %v332 = vmax.f32 %v316, %v321
      %v333 = vmax.f32 %v317, %v323
      %v334 = vmax.f32 %v318, %v325
      %v335 = vmax.f32 %v319, %v327
      %336 = vrot.lane.b32.xlu0 %v254, 108
      %v337 = vpop.permute.xlu0 %336
      %338 = vrot.lane.b32.xlu0 %v257, 108
      %v339 = vpop.permute.xlu0 %338
      %340 = vrot.lane.b32.xlu0 %v262, 108
      %v341 = vpop.permute.xlu0 %340
      %342 = vrot.lane.b32.xlu0 %v265, 108
      %v343 = vpop.permute.xlu0 %342
      %v348 = vmax.f32 %v332, %v337
      %v349 = vmax.f32 %v333, %v339
      %v350 = vmax.f32 %v334, %v341
      %v351 = vmax.f32 %v335, %v343
      %352 = vrot.lane.b32.xlu0 %v254, 104
      %v353 = vpop.permute.xlu0 %352
      %354 = vrot.lane.b32.xlu0 %v257, 104
      %v355 = vpop.permute.xlu0 %354
      %356 = vrot.lane.b32.xlu0 %v262, 104
      %v357 = vpop.permute.xlu0 %356
      %358 = vrot.lane.b32.xlu0 %v265, 104
      %v359 = vpop.permute.xlu0 %358
      %v364 = vmax.f32 %v348, %v353
      %v365 = vmax.f32 %v349, %v355
      %v366 = vmax.f32 %v350, %v357
      %v367 = vmax.f32 %v351, %v359
      %368 = vrot.lane.b32.xlu0 %v254, 100
      %v369 = vpop.permute.xlu0 %368
      %370 = vrot.lane.b32.xlu0 %v257, 100
      %v371 = vpop.permute.xlu0 %370
      %372 = vrot.lane.b32.xlu0 %v262, 100
      %v373 = vpop.permute.xlu0 %372
      %374 = vrot.lane.b32.xlu0 %v265, 100
      %v375 = vpop.permute.xlu0 %374
      %v380 = vmax.f32 %v364, %v369
      %v381 = vmax.f32 %v365, %v371
      %v382 = vmax.f32 %v366, %v373
      %v383 = vmax.f32 %v367, %v375
      %vm384 = vcmask 31744
      %v385 = vsel %vm384, %v380, -inf
      %386 = vmax.xlane.f32.xlu0 %v385
      %v387 = vpop.xlane.xlu0 %386
      %v388 = vsel %vm384, %v381, -inf
      %389 = vmax.xlane.f32.xlu0 %v388
      %v390 = vpop.xlane.xlu0 %389
      %v391 = vsel %vm384, %v382, -inf
      %392 = vmax.xlane.f32.xlu0 %v391
      %v393 = vpop.xlane.xlu0 %392
      %v394 = vsel %vm384, %v383, -inf
      %395 = vmax.xlane.f32.xlu0 %v394
      %v396 = vpop.xlane.xlu0 %395
      %v397 = vsub.f32 %v380, %v387
      %v398 = vsub.f32 %v381, %v390
      %v399 = vsub.f32 %v382, %v393
      %v400 = vsub.f32 %v383, %v396
      %v401 = vmul.f32 %v397, 1.442695
      %v402 = vpow.pop %v401
      %v403 = vmul.f32 %v398, 1.442695
      %v404 = vpow.pop %v403
      %v405 = vmul.f32 %v399, 1.442695
      %v406 = vpow.pop %v405
      %v407 = vmul.f32 %v400, 1.442695
      %v408 = vpow.pop %v407
      %v409 = vsel %vm384, %v402, 0.0
      %410 = vadd.xlane.f32.xlu0 %v409
      %v411 = vpop.xlane.xlu0 %410
      %v412 = vsel %vm384, %v404, 0.0
      %413 = vadd.xlane.f32.xlu0 %v412
      %v414 = vpop.xlane.xlu0 %413
      %v415 = vsel %vm384, %v406, 0.0
      %416 = vadd.xlane.f32.xlu0 %v415
      %v417 = vpop.xlane.xlu0 %416
      %v418 = vsel %vm384, %v408, 0.0
      %419 = vadd.xlane.f32.xlu0 %v418
      %v420 = vpop.xlane.xlu0 %419
      %v421 = vrcp.pop %v411
      %v422 = vmul.f32 %v402, %v421
      %v423 = vrcp.pop %v414
      %v424 = vmul.f32 %v404, %v423
      %v425 = vrcp.pop %v417
      %v426 = vmul.f32 %v406, %v425
      %v427 = vrcp.pop %v420
      %v428 = vmul.f32 %v408, %v427
      %429 = vst.msk [vmem:[%s172] sm:$0xff] %vm384, %v422
      %430 = vst.msk [vmem:[%s172 + $0x8] sm:$0xff] %vm384, %v424
      %431 = vst.msk [vmem:[%s172 + $0x10] sm:$0xff] %vm384, %v426
      %432 = vst.msk [vmem:[%s172 + $0x18] sm:$0xff] %vm384, %v428
      %s433 = smul.u32 4, %s14
      %p434 = scmp.lt.s32.totalorder %s433, 7
      %s435 = scalar_select %p434, %s433, 7
      %s436 = smul.addr %s435, 8
      %s437 = scalar_lea.vmem %s3, %s436
      // Predicated region
      $region33: #{tpu_custom_call.1} parent=31 // pred_check
        %p438 = pneg %p100
      $region34: #{tpu_custom_call.1} parent=31 // pred_check_branch
        %440 = sbr.rel (%p438) target = $region36
      $region35: #{tpu_custom_call.1} parent=31 // pred_region
        %s441 = smul.u32 4, %s14
      $region36: #{tpu_custom_call.1} parent=31 // pred_fallthru
        _
    $region32: #{tpu_custom_call.1} parent=5 // pred_fallthru
      _
    %p442 = scmp.le.s32.totalorder 2, %s9
    // Predicated region
    $region37: #{tpu_custom_call.1} parent=5 // pred_check
      %p443 = pneg %p442
    $region38: #{tpu_custom_call.1} parent=5 // pred_check_branch
      %445 = sbr.rel (%p443) target = $region40
    $region39: #{tpu_custom_call.1} parent=5 // pred_region
      %s446 = ssub.s32 %s9, 2
      // Predicated region
      $region41: #{tpu_custom_call.1} parent=39 // pred_check
        %p447 = pneg %p106
      $region42: #{tpu_custom_call.1} parent=39 // pred_check_branch
        %449 = sbr.rel (%p447) target = $region44
      $region43: #{tpu_custom_call.1} parent=39 // pred_region
        %s450 = smul.u32 4, %s15
        %p451 = scmp.lt.s32.totalorder %s450, 7
        %s452 = scalar_select %p451, %s450, 7
        %s453 = smul.addr %s452, 8
        %s454 = scalar_lea.vmem %s3, %s453
      $region44: #{tpu_custom_call.1} parent=39 // pred_fallthru
        _
    $region40: #{tpu_custom_call.1} parent=5 // pred_fallthru
      _
  $region6: #{tpu_custom_call.1} parent=0 // loop_footer
    %s13 = sadd.s32 1, %s9
  $region7: #{tpu_custom_call.1} parent=0 // loop_footer_branch
    %8 = sbr.rel target = $region3
  $region8: #{tpu_custom_call.1} parent=0 // loop_exit
    _

</llo_original>
